<compile_context>
chip_gen: v6e
topology: v6e:2x2x1
jax: 0.10.0
libtpu: 0.0.40
codegen_flags: <defaults>
</compile_context>

<pallas_src>
import functools

import jax
import jax.numpy as jnp
import numpy as np
from jax.experimental import pallas as pl
from jax.experimental.pallas import tpu as pltpu


def _loss_kernel(zg_ref, o_ref, y_ref, kw_ref, out_ref,
                 cls_acc, se_acc, cnt_acc, *, n_true):
    # zg_ref: (TN, D)   gathered embeddings z[n, y[n], :] for this N-tile
    # o_ref:  (TN, C)   logits tile
    # y_ref:  (TN, 1)   int32 labels tile (-1 for padded rows)
    # kw_ref: (C, D)    class prototypes, VMEM-resident across the whole grid
    # out_ref: (4,)     f32 SMEM output (total, classification, close, dist)
    # scratch: cls_acc (1,1), se_acc (1,C), cnt_acc (1,C) f32 VMEM accumulators
    step = pl.program_id(0)
    nsteps = pl.num_programs(0)
    TN, C = o_ref.shape
    D = zg_ref.shape[1]

    @pl.when(step == 0)
    def _init():
        cls_acc[...] = jnp.zeros_like(cls_acc)
        se_acc[...] = jnp.zeros_like(se_acc)
        cnt_acc[...] = jnp.zeros_like(cnt_acc)

    o = o_ref[...].astype(jnp.float32)              # (TN, C)
    y = y_ref[...]                                  # (TN, 1) int32
    zg = zg_ref[...].astype(jnp.float32)            # (TN, D)
    kw = kw_ref[...].astype(jnp.float32)            # (C, D)

    col = jax.lax.broadcasted_iota(jnp.int32, (TN, C), 1)
    onehot = (col == y).astype(jnp.float32)         # (TN, C); all-zero rows for pads

    # ---- classification MSE: partial sum over this tile ----
    diff_o = o - onehot
    cls_acc[...] += jnp.sum(diff_o * diff_o)

    # ---- clustering-close: per-sample squared error to own prototype ----
    # kw[y[n]] via a tiny MXU matmul (onehot selects the row; pad rows give 0)
    kw_y = jnp.dot(onehot, kw, preferred_element_type=jnp.float32)   # (TN, D)
    dz = zg - kw_y
    e = jnp.sum(dz * dz, axis=-1, keepdims=True)                     # (TN, 1)

    # per-class partial sums of squared error and sample counts
    se_acc[...] += jnp.sum(onehot * e, axis=0, keepdims=True)        # (1, C)
    cnt_acc[...] += jnp.sum(onehot, axis=0, keepdims=True)           # (1, C)

    @pl.when(step == nsteps - 1)
    def _finalize():
        loss_cls = jnp.sum(cls_acc[...]) / jnp.float32(n_true * C)

        # sum_c se_c / (n_c * D); NaN if a class has no samples (matches torch's
        # mean over an empty selection).
        loss_close = jnp.sum(se_acc[...] / (cnt_acc[...] * jnp.float32(D)))

        # clustering-dist via Gram matrix instead of a per-class loop:
        # sum_j ||kw_j - kw_c||^2 = S + C*||kw_c||^2 - 2 * rowsum(kw @ kw.T)_c
        sqn = jnp.sum(kw * kw, axis=-1, keepdims=True)               # (C, 1)
        gram = jnp.dot(kw, kw.T, preferred_element_type=jnp.float32) # (C, C)
        s_all = jnp.sum(sqn)
        pair = s_all + jnp.float32(C) * sqn - 2.0 * jnp.sum(gram, axis=-1,
                                                            keepdims=True)  # (C,1)
        mse = pair / jnp.float32((C - 1) * D)
        loss_dist = jnp.sum(jnp.maximum(1.0 - mse, 0.0)) / jnp.float32(C)

        total = loss_cls + loss_close + loss_dist
        out_ref[0] = total
        out_ref[1] = loss_cls
        out_ref[2] = loss_close
        out_ref[3] = loss_dist


def adaptive_clustering_loss(z, kernel_weight, o, y, *, tile_n=None):
    """z: (N, C, D), kernel_weight: (C, D), o: (N, C), y: (N,) int.

    Returns (total, loss_classification, loss_clustering_close, loss_clustering_dist)
    as float32 scalars.
    """
    N, C, D = z.shape
    assert kernel_weight.shape == (C, D)
    assert o.shape == (N, C)

    y_i32 = y.astype(jnp.int32)

    # Gather only the selected-class row z[n, y[n], :] -> (N, D). This cuts the
    # z HBM traffic by a factor of C and removes the old full-tensor transpose.
    zg = jnp.take_along_axis(z, y_i32[:, None, None], axis=1)[:, 0, :]   # (N, D)

    # Pick the N-tile: the biggest that keeps the double-buffered input blocks
    # comfortably inside v7x's 64 MiB VMEM (~8 MiB of live block bytes), capped
    # by the (8-padded) batch so tiny batches stay a single small tile.
    if tile_n is None:
        bytes_per_row = 2 * 4 * (D + C + 1)          # double-buffered f32 rows
        tile_n = max(8, min(1024, (8 * 1024 * 1024) // bytes_per_row))
        tile_n = (tile_n // 8) * 8
    n_round8 = ((N + 7) // 8) * 8
    tile_n = max(8, min(tile_n, n_round8))
    n_pad = ((N + tile_n - 1) // tile_n) * tile_n
    num_tiles = n_pad // tile_n

    o_p = o
    zg_p = zg
    if n_pad != N:
        pad = n_pad - N
        zg_p = jnp.pad(zg, ((0, pad), (0, 0)))
        o_p = jnp.pad(o, ((0, pad), (0, 0)))
        y_i32 = jnp.pad(y_i32, ((0, pad),), constant_values=-1)  # pad rows -> onehot 0
    y2d = y_i32.reshape(n_pad, 1)

    kernel = functools.partial(_loss_kernel, n_true=N)

    out = pl.pallas_call(
        kernel,
        out_shape=jax.ShapeDtypeStruct((4,), jnp.float32),
        grid_spec=pltpu.PrefetchScalarGridSpec(
            num_scalar_prefetch=0,
            grid=(num_tiles,),
            in_specs=[
                pl.BlockSpec((tile_n, D), lambda i: (i, 0)),              # zg
                pl.BlockSpec((tile_n, C), lambda i: (i, 0)),              # o
                pl.BlockSpec((tile_n, 1), lambda i: (i, 0)),              # y
                pl.BlockSpec(memory_space=pltpu.MemorySpace.VMEM),        # kw (resident)
            ],
            out_specs=pl.BlockSpec(memory_space=pltpu.MemorySpace.SMEM),
            scratch_shapes=[
                pltpu.VMEM((1, 1), jnp.float32),   # classification partial sum
                pltpu.VMEM((1, C), jnp.float32),   # per-class squared-error sums
                pltpu.VMEM((1, C), jnp.float32),   # per-class sample counts
            ],
        ),
        compiler_params=pltpu.CompilerParams(
            dimension_semantics=("arbitrary",),    # N axis is a reduction
        ),
    )(zg_p, o_p, y2d, kernel_weight)

    return out[0], out[1], out[2], out[3]


def _reference(z, kw, o, y):
    """Pure-numpy reference mirroring the PyTorch module."""
    z, kw, o = np.asarray(z, np.float32), np.asarray(kw, np.float32), np.asarray(o, np.float32)
    y = np.asarray(y)
    N, C = o.shape
    D = kw.shape[1]
    onehot = np.zeros_like(o)
    onehot[np.arange(N), y] = 1.0
    loss_cls = np.mean((o - onehot) ** 2)
    loss_close = 0.0
    for c in range(C):
        sel = z[y == c, c, :]
        loss_close += np.mean((sel - kw[c]) ** 2)
    loss_dist = 0.0
    for c in range(C):
        others = kw[np.arange(C) != c, :]
        mse = np.mean((others - kw[c]) ** 2)
        loss_dist += max(1.0 - mse, 0.0)
    loss_dist /= C
    return (loss_cls + loss_close + loss_dist, loss_cls, loss_close, loss_dist)


if __name__ == "__main__":
    key = jax.random.PRNGKey(0)
    N, C, D = 10, 4, 32  # batch, num_classes, embedding dim (exercises N padding)

    k1, k2, k3 = jax.random.split(key, 3)
    z = jax.random.normal(k1, (N, C, D), dtype=jnp.float32)
    kernel_weight = jax.random.normal(k2, (C, D), dtype=jnp.float32)
    o = jax.random.normal(k3, (N, C), dtype=jnp.float32)
    # every class represented so the per-class MSE is well-defined (as in torch)
    y = jnp.array([0, 1, 2, 3, 0, 1, 2, 3, 0, 1], dtype=jnp.int32)

    ref = _reference(z, kernel_weight, o, y)

    # default tile (single grid step at this size)
    total, l_cls, l_close, l_dist = adaptive_clustering_loss(z, kernel_weight, o, y)
    jax.block_until_ready(total)
    got = (float(total), float(l_cls), float(l_close), float(l_dist))
    np.testing.assert_allclose(got, ref, rtol=1e-5, atol=1e-5)

    # forced small tile -> multi-step grid, exercises the accumulate/finalize path
    total2, c2, cl2, d2 = adaptive_clustering_loss(z, kernel_weight, o, y, tile_n=8)
    jax.block_until_ready(total2)
    got2 = (float(total2), float(c2), float(cl2), float(d2))
    np.testing.assert_allclose(got2, ref, rtol=1e-5, atol=1e-5)

    print("KERNEL_OK")
</pallas_src>

<mosaic_0001>
module attributes {stable_mosaic.version = 11 : i64} {
  func.func @_loss_kernel(%arg0: i32, %arg1: memref<16x32xf32, #tpu.memory_space<vmem>>, %arg2: memref<16x4xf32, #tpu.memory_space<vmem>>, %arg3: memref<16x1xi32, #tpu.memory_space<vmem>>, %arg4: memref<4x32xf32, #tpu.memory_space<vmem>>, %arg5: memref<4xf32, #tpu.memory_space<smem>>, %arg6: memref<1x1xf32, #tpu.memory_space<vmem>>, %arg7: memref<1x4xf32, #tpu.memory_space<vmem>>, %arg8: memref<1x4xf32, #tpu.memory_space<vmem>>) attributes {dimension_semantics = [#tpu.dimension_semantics<arbitrary>], iteration_bounds = array<i64: 1>, scalar_prefetch = 0 : i64, scratch_operands = 3 : i64, tpu.core_type = #tpu.core_type<tc>, window_params = [{transform_indices = @transform_0, window_bounds = array<i64: 16, 32>}, {transform_indices = @transform_1, window_bounds = array<i64: 16, 4>}, {transform_indices = @transform_2, window_bounds = array<i64: 16, 1>}, {pipeline_mode = #tpu.pipeline_mode<synchronous>, transform_indices = @transform_3, window_bounds = array<i64: 4, 32>}, {transform_indices = @transform_4, window_bounds = array<i64: 4>}]} {
    %c0_i32 = arith.constant 0 : i32
    %0 = arith.cmpi eq, %arg0, %c0_i32 : i32
    %1 = arith.extui %0 : i1 to i32
    %c0_i32_0 = arith.constant 0 : i32
    %2 = arith.cmpi ne, %1, %c0_i32_0 : i32
    scf.if %2 {
      %cst_26 = arith.constant 0.000000e+00 : f32
      %42 = vector.broadcast %cst_26 : f32 to vector<1x1xf32>
      %c0_27 = arith.constant 0 : index
      %c0_28 = arith.constant 0 : index
      %43 = vector.load %arg6[%c0_27, %c0_28] : memref<1x1xf32, #tpu.memory_space<vmem>>, vector<1x1xf32>
      tpu.vector_store %arg6[%c0_27, %c0_28], %42 {strides = array<i32>} : memref<1x1xf32, #tpu.memory_space<vmem>>, vector<1x1xf32>,
      %cst_29 = arith.constant 0.000000e+00 : f32
      %44 = vector.broadcast %cst_29 : f32 to vector<1x4xf32>
      %c0_30 = arith.constant 0 : index
      %c0_31 = arith.constant 0 : index
      %45 = vector.load %arg7[%c0_30, %c0_31] : memref<1x4xf32, #tpu.memory_space<vmem>>, vector<1x4xf32>
      tpu.vector_store %arg7[%c0_30, %c0_31], %44 {strides = array<i32>} : memref<1x4xf32, #tpu.memory_space<vmem>>, vector<1x4xf32>,
      %cst_32 = arith.constant 0.000000e+00 : f32
      %46 = vector.broadcast %cst_32 : f32 to vector<1x4xf32>
      %c0_33 = arith.constant 0 : index
      %c0_34 = arith.constant 0 : index
      %47 = vector.load %arg8[%c0_33, %c0_34] : memref<1x4xf32, #tpu.memory_space<vmem>>, vector<1x4xf32>
      tpu.vector_store %arg8[%c0_33, %c0_34], %46 {strides = array<i32>} : memref<1x4xf32, #tpu.memory_space<vmem>>, vector<1x4xf32>,
    } else {
    }
    %c0 = arith.constant 0 : index
    %c0_1 = arith.constant 0 : index
    %3 = vector.load %arg2[%c0, %c0_1] : memref<16x4xf32, #tpu.memory_space<vmem>>, vector<16x4xf32>
    %c0_2 = arith.constant 0 : index
    %c0_3 = arith.constant 0 : index
    %4 = vector.load %arg3[%c0_2, %c0_3] : memref<16x1xi32, #tpu.memory_space<vmem>>, vector<16x1xi32>
    %c0_4 = arith.constant 0 : index
    %c0_5 = arith.constant 0 : index
    %5 = vector.load %arg1[%c0_4, %c0_5] : memref<16x32xf32, #tpu.memory_space<vmem>>, vector<16x32xf32>
    %c0_6 = arith.constant 0 : index
    %c0_7 = arith.constant 0 : index
    %6 = vector.load %arg4[%c0_6, %c0_7] : memref<4x32xf32, #tpu.memory_space<vmem>>, vector<4x32xf32>
    %7 = tpu.iota {dimensions = array<i32: 1>} : vector<16x4xi32>
    %8 = vector.broadcast %4 : vector<16x1xi32> to vector<16x4xi32>
    %9 = arith.cmpi eq, %7, %8 : vector<16x4xi32>
    %10 = arith.extui %9 : vector<16x4xi1> to vector<16x4xi32>
    %11 = arith.sitofp %10 : vector<16x4xi32> to vector<16x4xf32>
    %12 = arith.subf %3, %11 : vector<16x4xf32>
    %c0_8 = arith.constant 0 : index
    %c0_9 = arith.constant 0 : index
    %13 = vector.load %arg6[%c0_8, %c0_9] : memref<1x1xf32, #tpu.memory_space<vmem>>, vector<1x1xf32>
    %14 = arith.mulf %12, %12 : vector<16x4xf32>
    %15 = vector.shape_cast %14 : vector<16x4xf32> to vector<1x16x4xf32>
    %cst = arith.constant dense<0.000000e+00> : vector<1xf32>
    %16 = vector.multi_reduction <add>, %15, %cst [1, 2] : vector<1x16x4xf32> to vector<1xf32>
    %17 = vector.shape_cast %16 : vector<1xf32> to vector<1x1x1xf32>
    %18 = vector.extract %17[0, 0, 0] : f32 from vector<1x1x1xf32>
    %19 = vector.broadcast %18 : f32 to vector<1x1xf32>
    %20 = arith.addf %13, %19 : vector<1x1xf32>
    %c0_10 = arith.constant 0 : index
    %c0_11 = arith.constant 0 : index
    %21 = vector.load %arg6[%c0_10, %c0_11] : memref<1x1xf32, #tpu.memory_space<vmem>>, vector<1x1xf32>
    tpu.vector_store %arg6[%c0_10, %c0_11], %20 {strides = array<i32>} : memref<1x1xf32, #tpu.memory_space<vmem>>, vector<1x1xf32>,
    %cst_12 = arith.constant dense<0.000000e+00> : vector<16x32xf32>
    %22 = tpu.matmul %11, %6, %cst_12 {dimension_numbers = #tpu.dot_dimension_numbers<[1], [0], [0], [1], [0, 0, 1, 1], [], []>} : vector<16x4xf32>, vector<4x32xf32>, vector<16x32xf32> -> vector<16x32xf32>
    %23 = arith.subf %5, %22 : vector<16x32xf32>
    %24 = arith.mulf %23, %23 : vector<16x32xf32>
    %cst_13 = arith.constant dense<0.000000e+00> : vector<16xf32>
    %25 = vector.multi_reduction <add>, %24, %cst_13 [1] : vector<16x32xf32> to vector<16xf32>
    %26 = vector.shape_cast %25 : vector<16xf32> to vector<16x1xf32>
    %c0_14 = arith.constant 0 : index
    %c0_15 = arith.constant 0 : index
    %27 = vector.load %arg7[%c0_14, %c0_15] : memref<1x4xf32, #tpu.memory_space<vmem>>, vector<1x4xf32>
    %28 = vector.broadcast %26 : vector<16x1xf32> to vector<16x4xf32>
    %29 = arith.mulf %11, %28 : vector<16x4xf32>
    %cst_16 = arith.constant dense<0.000000e+00> : vector<4xf32>
    %30 = vector.multi_reduction <add>, %29, %cst_16 [0] : vector<16x4xf32> to vector<4xf32>
    %31 = vector.shape_cast %30 : vector<4xf32> to vector<1x4xf32>
    %32 = arith.addf %27, %31 : vector<1x4xf32>
    %c0_17 = arith.constant 0 : index
    %c0_18 = arith.constant 0 : index
    %33 = vector.load %arg7[%c0_17, %c0_18] : memref<1x4xf32, #tpu.memory_space<vmem>>, vector<1x4xf32>
    tpu.vector_store %arg7[%c0_17, %c0_18], %32 {strides = array<i32>} : memref<1x4xf32, #tpu.memory_space<vmem>>, vector<1x4xf32>,
    %c0_19 = arith.constant 0 : index
    %c0_20 = arith.constant 0 : index
    %34 = vector.load %arg8[%c0_19, %c0_20] : memref<1x4xf32, #tpu.memory_space<vmem>>, vector<1x4xf32>
    %cst_21 = arith.constant dense<0.000000e+00> : vector<4xf32>
    %35 = vector.multi_reduction <add>, %11, %cst_21 [0] : vector<16x4xf32> to vector<4xf32>
    %36 = vector.shape_cast %35 : vector<4xf32> to vector<1x4xf32>
    %37 = arith.addf %34, %36 : vector<1x4xf32>
    %c0_22 = arith.constant 0 : index
    %c0_23 = arith.constant 0 : index
    %38 = vector.load %arg8[%c0_22, %c0_23] : memref<1x4xf32, #tpu.memory_space<vmem>>, vector<1x4xf32>
    tpu.vector_store %arg8[%c0_22, %c0_23], %37 {strides = array<i32>} : memref<1x4xf32, #tpu.memory_space<vmem>>, vector<1x4xf32>,
    %c0_i32_24 = arith.constant 0 : i32
    %39 = arith.cmpi eq, %arg0, %c0_i32_24 : i32
    %40 = arith.extui %39 : i1 to i32
    %c0_i32_25 = arith.constant 0 : i32
    %41 = arith.cmpi ne, %40, %c0_i32_25 : i32
    scf.if %41 {
      %c0_26 = arith.constant 0 : index
      %c0_27 = arith.constant 0 : index
      %42 = vector.load %arg6[%c0_26, %c0_27] : memref<1x1xf32, #tpu.memory_space<vmem>>, vector<1x1xf32>
      %43 = vector.shape_cast %42 : vector<1x1xf32> to vector<1x1x1xf32>
      %cst_28 = arith.constant dense<0.000000e+00> : vector<1xf32>
      %44 = vector.multi_reduction <add>, %43, %cst_28 [1, 2] : vector<1x1x1xf32> to vector<1xf32>
      %45 = vector.shape_cast %44 : vector<1xf32> to vector<1x1x1xf32>
      %46 = vector.extract %45[0, 0, 0] : f32 from vector<1x1x1xf32>
      %cst_29 = arith.constant 4.000000e+01 : f32
      %47 = arith.divf %46, %cst_29 : f32
      %c0_30 = arith.constant 0 : index
      %c0_31 = arith.constant 0 : index
      %48 = vector.load %arg7[%c0_30, %c0_31] : memref<1x4xf32, #tpu.memory_space<vmem>>, vector<1x4xf32>
      %c0_32 = arith.constant 0 : index
      %c0_33 = arith.constant 0 : index
      %49 = vector.load %arg8[%c0_32, %c0_33] : memref<1x4xf32, #tpu.memory_space<vmem>>, vector<1x4xf32>
      %cst_34 = arith.constant 3.200000e+01 : f32
      %50 = vector.broadcast %cst_34 : f32 to vector<1x4xf32>
      %51 = arith.mulf %49, %50 : vector<1x4xf32>
      %52 = arith.divf %48, %51 : vector<1x4xf32>
      %53 = vector.shape_cast %52 : vector<1x4xf32> to vector<1x1x4xf32>
      %cst_35 = arith.constant dense<0.000000e+00> : vector<1xf32>
      %54 = vector.multi_reduction <add>, %53, %cst_35 [1, 2] : vector<1x1x4xf32> to vector<1xf32>
      %55 = vector.shape_cast %54 : vector<1xf32> to vector<1x1x1xf32>
      %56 = vector.extract %55[0, 0, 0] : f32 from vector<1x1x1xf32>
      %57 = arith.mulf %6, %6 : vector<4x32xf32>
      %cst_36 = arith.constant dense<0.000000e+00> : vector<4xf32>
      %58 = vector.multi_reduction <add>, %57, %cst_36 [1] : vector<4x32xf32> to vector<4xf32>
      %59 = vector.shape_cast %58 : vector<4xf32> to vector<4x1xf32>
      %60 = tpu.transpose %6, [1, 0] : vector<4x32xf32> -> vector<32x4xf32>
      %cst_37 = arith.constant dense<0.000000e+00> : vector<4x4xf32>
      %61 = tpu.matmul %6, %60, %cst_37 {dimension_numbers = #tpu.dot_dimension_numbers<[1], [0], [0], [1], [0, 0, 1, 1], [], []>} : vector<4x32xf32>, vector<32x4xf32>, vector<4x4xf32> -> vector<4x4xf32>
      %62 = vector.shape_cast %59 : vector<4x1xf32> to vector<1x4x1xf32>
      %cst_38 = arith.constant dense<0.000000e+00> : vector<1xf32>
      %63 = vector.multi_reduction <add>, %62, %cst_38 [1, 2] : vector<1x4x1xf32> to vector<1xf32>
      %64 = vector.shape_cast %63 : vector<1xf32> to vector<1x1x1xf32>
      %65 = vector.extract %64[0, 0, 0] : f32 from vector<1x1x1xf32>
      %cst_39 = arith.constant 4.000000e+00 : f32
      %66 = vector.broadcast %cst_39 : f32 to vector<4x1xf32>
      %67 = arith.mulf %66, %59 : vector<4x1xf32>
      %68 = vector.broadcast %65 : f32 to vector<4x1xf32>
      %69 = arith.addf %68, %67 : vector<4x1xf32>
      %cst_40 = arith.constant dense<0.000000e+00> : vector<4xf32>
      %70 = vector.multi_reduction <add>, %61, %cst_40 [1] : vector<4x4xf32> to vector<4xf32>
      %71 = vector.shape_cast %70 : vector<4xf32> to vector<4x1xf32>
      %cst_41 = arith.constant 2.000000e+00 : f32
      %72 = vector.broadcast %cst_41 : f32 to vector<4x1xf32>
      %73 = arith.mulf %72, %71 : vector<4x1xf32>
      %74 = arith.subf %69, %73 : vector<4x1xf32>
      %cst_42 = arith.constant 9.600000e+01 : f32
      %75 = vector.broadcast %cst_42 : f32 to vector<4x1xf32>
      %76 = arith.divf %74, %75 : vector<4x1xf32>
      %cst_43 = arith.constant 1.000000e+00 : f32
      %77 = vector.broadcast %cst_43 : f32 to vector<4x1xf32>
      %78 = arith.subf %77, %76 : vector<4x1xf32>
      %cst_44 = arith.constant 0.000000e+00 : f32
      %79 = vector.broadcast %cst_44 : f32 to vector<4x1xf32>
      %80 = arith.maximumf %78, %79 : vector<4x1xf32>
      %81 = vector.shape_cast %80 : vector<4x1xf32> to vector<1x4x1xf32>
      %cst_45 = arith.constant dense<0.000000e+00> : vector<1xf32>
      %82 = vector.multi_reduction <add>, %81, %cst_45 [1, 2] : vector<1x4x1xf32> to vector<1xf32>
      %83 = vector.shape_cast %82 : vector<1xf32> to vector<1x1x1xf32>
      %84 = vector.extract %83[0, 0, 0] : f32 from vector<1x1x1xf32>
      %cst_46 = arith.constant 4.000000e+00 : f32
      %85 = arith.divf %84, %cst_46 : f32
      %86 = arith.addf %47, %56 : f32
      %87 = arith.addf %86, %85 : f32
      %c0_47 = arith.constant 0 : index
      %88 = memref.load %arg5[%c0_47] : memref<4xf32, #tpu.memory_space<smem>>
      memref.store %87, %arg5[%c0_47] : memref<4xf32, #tpu.memory_space<smem>>
      %c1 = arith.constant 1 : index
      %89 = memref.load %arg5[%c1] : memref<4xf32, #tpu.memory_space<smem>>
      memref.store %47, %arg5[%c1] : memref<4xf32, #tpu.memory_space<smem>>
      %c2 = arith.constant 2 : index
      %90 = memref.load %arg5[%c2] : memref<4xf32, #tpu.memory_space<smem>>
      memref.store %56, %arg5[%c2] : memref<4xf32, #tpu.memory_space<smem>>
      %c3 = arith.constant 3 : index
      %91 = memref.load %arg5[%c3] : memref<4xf32, #tpu.memory_space<smem>>
      memref.store %85, %arg5[%c3] : memref<4xf32, #tpu.memory_space<smem>>
    } else {
    }
    return
  }
  func.func @transform_0(%arg0: i32) -> (i32, i32) {
    %c0_i32 = arith.constant 0 : i32
    %c0_i32_0 = arith.constant 0 : i32
    return %arg0, %c0_i32 : i32, i32
  }
  func.func @transform_1(%arg0: i32) -> (i32, i32) {
    %c0_i32 = arith.constant 0 : i32
    %c0_i32_0 = arith.constant 0 : i32
    return %arg0, %c0_i32 : i32, i32
  }
  func.func @transform_2(%arg0: i32) -> (i32, i32) {
    %c0_i32 = arith.constant 0 : i32
    %c0_i32_0 = arith.constant 0 : i32
    return %arg0, %c0_i32 : i32, i32
  }
  func.func @transform_3(%arg0: i32) -> (i32, i32) {
    %c0_i32 = arith.constant 0 : i32
    %c0_i32_0 = arith.constant 0 : i32
    %c0_i32_1 = arith.constant 0 : i32
    return %c0_i32, %c0_i32_0 : i32, i32
  }
  func.func @transform_4(%arg0: i32) -> i32 {
    %c0_i32 = arith.constant 0 : i32
    %c0_i32_0 = arith.constant 0 : i32
    return %c0_i32 : i32
  }
}

</mosaic_0001>

<llo_original>
// kernel: tpu_custom_call.1
$region0: #{tpu_custom_call.1}
  #allocation0 [shape = 'u32[]', space=smem, size = 0x4, offset = 0x4, fixed_abs, tag = 'smem constant byte address 0x4 - core index']
  #allocation1 [shape = 'u32[144,128]{1,0:T(1,128)}', space=vmem, size = 0x12000, scoped, tag = 'internal scratch']
  #allocation2 [shape = 'f32[1,1]{1,0:T(1,128)}', space=vmem, size = 0x200, scoped, tag = 'scratch operand']
  #allocation3 [shape = 'f32[1,4]{1,0:T(1,128)}', space=vmem, size = 0x200, scoped, tag = 'scratch operand']
  #allocation4 [shape = 'f32[1,4]{1,0:T(1,128)}', space=vmem, size = 0x200, scoped, tag = 'scratch operand']
  %s0 = inlined_call_operand.vmem [shape: f32[16,32], index: 0, kind: input, shape index: {}]
  %s1 = inlined_call_operand.vmem [shape: f32[16,4], index: 1, kind: input, shape index: {}]
  %s2 = inlined_call_operand.vmem [shape: s32[16,1], index: 2, kind: input, shape index: {}]
  %s3 = inlined_call_operand.vmem [shape: f32[4,32], index: 3, kind: input, shape index: {}]
  %s4 = inlined_call_operand.hbm [shape: f32[4], index: 4, kind: output, shape index: {}]
  %s5 = sld [smem:[#allocation0]]
  $region34: #{tpu_custom_call.1} parent=0
    _
  %s7 = ssub.s32 1, %s5
  %s8 = scalar_select 0, %s7, %s5
  $region1: #{tpu_custom_call.1} parent=0
    #allocation5 [shape = 'u8[512]{0}', space=smem, size = 0x200, scoped, tag = 'output window, operand 0, single buffered']
    #allocation6 [shape = 's32[1]{0}', space=sflag, size = 0x4, scoped, tag = 'scoped memory for tpu_custom_call.1']
    %9 = vsyncpa [#allocation6], 0
    // Predicated region
    $region2: #{tpu_custom_call.1} parent=1 // pred_check
      _
    $region3: #{tpu_custom_call.1} parent=1 // pred_check_branch
      %11 = sbr.rel (0) target = $region5
    $region4: #{tpu_custom_call.1} parent=1 // pred_region
      _
    $region5: #{tpu_custom_call.1} parent=1 // pred_fallthru
      _
    // Predicated region
    $region6: #{tpu_custom_call.1} parent=1 // pred_check
      _
    $region7: #{tpu_custom_call.1} parent=1 // pred_check_branch
      %13 = sbr.rel (0) target = $region9
    $region8: #{tpu_custom_call.1} parent=1 // pred_region
      _
    $region9: #{tpu_custom_call.1} parent=1 // pred_fallthru
      _
    // Predicated region
    $region10: #{tpu_custom_call.1} parent=1 // pred_check
      _
    $region11: #{tpu_custom_call.1} parent=1 // pred_check_branch
      %15 = sbr.rel (0) target = $region13
    $region12: #{tpu_custom_call.1} parent=1 // pred_region
      _
    $region13: #{tpu_custom_call.1} parent=1 // pred_fallthru
      _
    // Predicated region
    $region14: #{tpu_custom_call.1} parent=1 // pred_check
      _
    $region15: #{tpu_custom_call.1} parent=1 // pred_check_branch
      %17 = sbr.rel (0) target = $region17
    $region16: #{tpu_custom_call.1} parent=1 // pred_region
      _
    $region17: #{tpu_custom_call.1} parent=1 // pred_fallthru
      _
    %p18 = scmp.eq.s32.totalorder 0, 0
    // Predicated region
    $region18: #{tpu_custom_call.1} parent=1 // pred_check
      %p19 = pneg %p18
    $region19: #{tpu_custom_call.1} parent=1 // pred_check_branch
      %21 = sbr.rel (%p19) target = $region21
    $region20: #{tpu_custom_call.1} parent=1 // pred_region
      %vm22 = vcmask 0
      %23 = vst.msk [vmem:[#allocation2] sm:$0x1] %vm22, 0.0
      %vm24 = vcmask 24576
      %25 = vst.msk [vmem:[#allocation3] sm:$0x1] %vm24, 0.0
      %26 = vst.msk [vmem:[#allocation4] sm:$0x1] %vm24, 0.0
    $region21: #{tpu_custom_call.1} parent=1 // pred_fallthru
      _
    %v27 = vld [vmem:[%s1] sm:$0xff]
    %v28 = vld [vmem:[%s1 + $0x8] sm:$0xff]
    %v29 = vld [vmem:[%s2] sm:$0xff]
    %v30 = vld [vmem:[%s2 + $0x8] sm:$0xff]
    %v31 = vld [vmem:[%s0] sm:$0xff]
    %v32 = vld [vmem:[%s0 + $0x8] sm:$0xff]
    %v33 = vld [vmem:[%s3] sm:$0xf]
    %v34 = vlaneseq
    %v35 = vand.u32 %v34, 127
    %36 = vset.pattern.permute.xlu0 0
    %37 = vperm.xlu0 %36, %v29
    %v38 = vpop.permute.xlu0 %37
    %39 = vset.pattern.permute.xlu0 0
    %40 = vperm.xlu0 %39, %v30
    %v41 = vpop.permute.xlu0 %40
    %vm42 = vcmp.eq.s32.totalorder %v35, %v38
    %vm43 = vcmp.eq.s32.totalorder %v35, %v41
    %v44 = vsel %vm42, 1, 0
    %v45 = vsel %vm43, 1, 0
    %v46 = vcvt.s32.f32 %v44
    %v47 = vcvt.s32.f32 %v45
    %v48 = vsub.f32 %v27, %v46
    %v49 = vsub.f32 %v28, %v47
    %v50 = vld [vmem:[#allocation2] sm:$0x1]
    %v51 = vmul.f32 %v48, %v48
    %v52 = vmul.f32 %v49, %v49
    %vm53 = vcmask 31744
    %v54 = vsel %vm53, %v51, 0.0
    %v55 = vsel %vm53, %v52, 0.0
    %v56 = vadd.f32 %v54, %v55
    %57 = vadd.xlane.f32.xlu0 %v56
    %v58 = vpop.xlane.xlu0 %57
    %v59 = vrot.slane %v58, 4
    %v60 = vadd.f32 %v58, %v59
    %v61 = vrot.slane %v60, 2
    %v62 = vadd.f32 %v60, %v61
    %v63 = vrot.slane %v62, 1
    %v64 = vadd.f32 %v62, %v63
    %s65 = vtos %v64
    %v66 = vstv %s65
    %v67 = vadd.f32 %v50, %v66
    %vm68 = vcmask 0
    %69 = vst.msk [vmem:[#allocation2] sm:$0x1] %vm68, %v67
    %v71 = vsel %vm53, %v46, 0
    %v74 = vsel %vm53, %v47, 0
    %vm76 = vcmask 1043456
    %v78 = vsel %vm76, %v33, 0
    %80 = vmatprep.subr.mxu0 0.0
    %81 = vmatpush1.msra.mxu0 0.0
    %82 = vmatprep.subr.mxu0 0.0
    %83 = vmatpush1.msra.mxu0 0.0
    %84 = vmatprep.subr.mxu0 0.0
    %85 = vmatpush1.msra.mxu0 0.0
    %86 = vmatprep.subr.mxu0 0.0
    %87 = vmatpush1.msra.mxu0 0.0
    %88 = vmatprep.subr.mxu0 0.0
    %89 = vmatpush1.msra.mxu0 0.0
    %90 = vmatprep.subr.mxu0 0.0
    %91 = vmatpush1.msra.mxu0 0.0
    %92 = vmatprep.subr.mxu0 0.0
    %93 = vmatpush1.msra.mxu0 0.0
    %94 = vmatprep.subr.mxu0 0.0
    %95 = vmatpush1.msra.mxu0 0.0
    %96 = vmatprep.subr.mxu0 0.0
    %97 = vmatpush1.msra.mxu0 0.0
    %98 = vmatprep.subr.mxu0 0.0
    %99 = vmatpush1.msra.mxu0 0.0
    %100 = vmatprep.subr.mxu0 0.0
    %101 = vmatpush1.msra.mxu0 0.0
    %102 = vmatprep.subr.mxu0 0.0
    %103 = vmatpush1.msra.mxu0 0.0
    %104 = vmatprep.subr.mxu0 0.0
    %105 = vmatpush1.msra.mxu0 0.0
    %106 = vmatprep.subr.mxu0 0.0
    %107 = vmatpush1.msra.mxu0 0.0
    %108 = vmatprep.subr.mxu0 0.0
    %109 = vmatpush1.msra.mxu0 0.0
    %110 = vmatprep.subr.mxu0 0.0
    %111 = vmatpush1.msra.mxu0 %v78
    %112 = vmatprep.subr.mxu0 0.0
    %113 = vmatpush2.msra.mxu0 0.0
    %114 = vmatprep.subr.mxu0 0.0
    %115 = vmatpush2.msra.mxu0 0.0
    %116 = vmatprep.subr.mxu0 0.0
    %117 = vmatpush2.msra.mxu0 0.0
    %118 = vmatprep.subr.mxu0 0.0
    %119 = vmatpush2.msra.mxu0 0.0
    %120 = vmatprep.subr.mxu0 0.0
    %121 = vmatpush2.msra.mxu0 0.0
    %122 = vmatprep.subr.mxu0 0.0
    %123 = vmatpush2.msra.mxu0 0.0
    %124 = vmatprep.subr.mxu0 0.0
    %125 = vmatpush2.msra.mxu0 0.0
    %126 = vmatprep.subr.mxu0 0.0
    %127 = vmatpush2.msra.mxu0 0.0
    %128 = vmatprep.subr.mxu0 0.0
    %129 = vmatpush2.msra.mxu0 0.0
    %130 = vmatprep.subr.mxu0 0.0
    %131 = vmatpush2.msra.mxu0 0.0
    %132 = vmatprep.subr.mxu0 0.0
    %133 = vmatpush2.msra.mxu0 0.0
    %134 = vmatprep.subr.mxu0 0.0
    %135 = vmatpush2.msra.mxu0 0.0
    %136 = vmatprep.subr.mxu0 0.0
    %137 = vmatpush2.msra.mxu0 0.0
    %138 = vmatprep.subr.mxu0 0.0
    %139 = vmatpush2.msra.mxu0 0.0
    %140 = vmatprep.subr.mxu0 0.0
    %141 = vmatpush2.msra.mxu0 0.0
    %142 = vmatprep.subr.mxu0 0.0
    %143 = vmatpush2.msra.mxu0 0.0
    %144 = vmatprep.mubr.f32.mxu0 0.0
    %145 = vmatmul.mubr.f32.gmra.mxu0 %v71
    %v146 = vpop.f32.mrf.mxu0
    %v147 = vadd.f32 0.0, %v146
    %v148 = vpop.f32.mrf.mxu0
    %149 = vmatprep.mubr.f32.mxu0 0.0
    %150 = vmatmul.mubr.f32.gmra.mxu0 %v74
    %v151 = vpop.f32.mrf.mxu0
    %v152 = vadd.f32 0.0, %v151
    %v153 = vpop.f32.mrf.mxu0
    %154 = vdwg.mxu0
    %v155 = vsub.f32 %v31, %v147
    %v156 = vsub.f32 %v32, %v152
    %v157 = vmul.f32 %v155, %v155
    %v158 = vmul.f32 %v156, %v156
    %vm159 = vcmask 261120
    %v160 = vsel %vm159, %v157, 0.0
    %161 = vadd.xlane.f32.xlu0 %v160
    %v162 = vpop.xlane.xlu0 %161
    %v163 = vsel %vm159, %v158, 0.0
    %164 = vadd.xlane.f32.xlu0 %v163
    %v165 = vpop.xlane.xlu0 %164
    %v166 = vld [vmem:[#allocation3] sm:$0x1]
    %v167 = vmul.f32 %v46, %v162
    %v168 = vmul.f32 %v47, %v165
    %v169 = vsel %vm53, %v167, 0.0
    %v170 = vsel %vm53, %v168, 0.0
    %v171 = vadd.f32 %v169, %v170
    %v172 = vrot.slane %v171, 4
    %v173 = vadd.f32 %v171, %v172
    %v174 = vrot.slane %v173, 2
    %v175 = vadd.f32 %v173, %v174
    %v176 = vrot.slane %v175, 1
    %v177 = vadd.f32 %v175, %v176
    %v178 = vadd.f32 %v166, %v177
    %vm179 = vcmask 24576
    %180 = vst.msk [vmem:[#allocation3] sm:$0x1] %vm179, %v178
    %v181 = vld [vmem:[#allocation4] sm:$0x1]
    %v182 = vsel %vm53, %v46, 0.0
    %v183 = vsel %vm53, %v47, 0.0
    %v184 = vadd.f32 %v182, %v183
    %v185 = vrot.slane %v184, 4
    %v186 = vadd.f32 %v184, %v185
    %v187 = vrot.slane %v186, 2
    %v188 = vadd.f32 %v186, %v187
    %v189 = vrot.slane %v188, 1
    %v190 = vadd.f32 %v188, %v189
    %v191 = vadd.f32 %v181, %v190
    %192 = vst.msk [vmem:[#allocation4] sm:$0x1] %vm179, %v191
    // Predicated region
    $region22: #{tpu_custom_call.1} parent=1 // pred_check
      %p193 = pneg %p18
    $region23: #{tpu_custom_call.1} parent=1 // pred_check_branch
      %195 = sbr.rel (%p193) target = $region25
    $region24: #{tpu_custom_call.1} parent=1 // pred_region
      %v196 = vld [vmem:[#allocation2] sm:$0x1]
      %v197 = vadd.f32 %v196, 0.0
      %s198 = vtos %v197
      %v199 = vrcp.pop 40.0
      %s200 = vtos %v199
      %s201 = smul.f32 %s198, %s200
      %v202 = vld [vmem:[#allocation3] sm:$0x1]
      %v203 = vld [vmem:[#allocation4] sm:$0x1]
      %v204 = vmul.f32 %v203, 32.0
      %v205 = vrcp.pop %v204
      %v206 = vmul.f32 %v202, %v205
      %v207 = vsel %vm179, %v206, 0.0
      %208 = vadd.xlane.f32.xlu0 %v207
      %v209 = vpop.xlane.xlu0 %208
      %v210 = vrot.slane %v209, 4
      %v211 = vadd.f32 %v209, %v210
      %v212 = vrot.slane %v211, 2
      %v213 = vadd.f32 %v211, %v212
      %v214 = vrot.slane %v213, 1
      %v215 = vadd.f32 %v213, %v214
      %s216 = vtos %v215
      %v217 = vmul.f32 %v33, %v33
      %vm218 = vcmask 257024
      %v219 = vsel %vm218, %v217, 0.0
      %220 = vadd.xlane.f32.xlu0 %v219
      %v221 = vpop.xlane.xlu0 %220
      %v222 = vsel %vm159, %v33, 0
      %224 = vmatprep.subr.mxu0 0.0
      %225 = vmatpush1.xpose.msra.mxu0 0.0
      %226 = vmatprep.subr.mxu0 0.0
      %227 = vmatpush1.xpose.msra.mxu0 0.0
      %228 = vmatprep.subr.mxu0 0.0
      %229 = vmatpush1.xpose.msra.mxu0 0.0
      %230 = vmatprep.subr.mxu0 0.0
      %231 = vmatpush1.xpose.msra.mxu0 0.0
      %232 = vmatprep.subr.mxu0 0.0
      %233 = vmatpush1.xpose.msra.mxu0 0.0
      %234 = vmatprep.subr.mxu0 0.0
      %235 = vmatpush1.xpose.msra.mxu0 0.0
      %236 = vmatprep.subr.mxu0 0.0
      %237 = vmatpush1.xpose.msra.mxu0 0.0
      %238 = vmatprep.subr.mxu0 0.0
      %239 = vmatpush1.xpose.msra.mxu0 0.0
      %240 = vmatprep.subr.mxu0 0.0
      %241 = vmatpush1.xpose.msra.mxu0 0.0
      %242 = vmatprep.subr.mxu0 0.0
      %243 = vmatpush1.xpose.msra.mxu0 0.0
      %244 = vmatprep.subr.mxu0 0.0
      %245 = vmatpush1.xpose.msra.mxu0 0.0
      %246 = vmatprep.subr.mxu0 0.0
      %247 = vmatpush1.xpose.msra.mxu0 0.0
      %248 = vmatprep.subr.mxu0 0.0
      %249 = vmatpush1.xpose.msra.mxu0 0.0
      %250 = vmatprep.subr.mxu0 0.0
      %251 = vmatpush1.xpose.msra.mxu0 0.0
      %252 = vmatprep.subr.mxu0 0.0
      %253 = vmatpush1.xpose.msra.mxu0 0.0
      %254 = vmatprep.subr.mxu0 0.0
      %255 = vmatpush1.xpose.msra.mxu0 %v222
      %256 = vmatprep.subr.mxu0 0.0
      %257 = vmatpush2.xpose.msra.mxu0 0.0
      %258 = vmatprep.subr.mxu0 0.0
      %259 = vmatpush2.xpose.msra.mxu0 0.0
      %260 = vmatprep.subr.mxu0 0.0
      %261 = vmatpush2.xpose.msra.mxu0 0.0
      %262 = vmatprep.subr.mxu0 0.0
      %263 = vmatpush2.xpose.msra.mxu0 0.0
      %264 = vmatprep.subr.mxu0 0.0
      %265 = vmatpush2.xpose.msra.mxu0 0.0
      %266 = vmatprep.subr.mxu0 0.0
      %267 = vmatpush2.xpose.msra.mxu0 0.0
      %268 = vmatprep.subr.mxu0 0.0
      %269 = vmatpush2.xpose.msra.mxu0 0.0
      %270 = vmatprep.subr.mxu0 0.0
      %271 = vmatpush2.xpose.msra.mxu0 0.0
      %272 = vmatprep.subr.mxu0 0.0
      %273 = vmatpush2.xpose.msra.mxu0 0.0
      %274 = vmatprep.subr.mxu0 0.0
      %275 = vmatpush2.xpose.msra.mxu0 0.0
      %276 = vmatprep.subr.mxu0 0.0
      %277 = vmatpush2.xpose.msra.mxu0 0.0
      %278 = vmatprep.subr.mxu0 0.0
      %279 = vmatpush2.xpose.msra.mxu0 0.0
      %280 = vmatprep.subr.mxu0 0.0
      %281 = vmatpush2.xpose.msra.mxu0 0.0
      %282 = vmatprep.subr.mxu0 0.0
      %283 = vmatpush2.xpose.msra.mxu0 0.0
      %284 = vmatprep.subr.mxu0 0.0
      %285 = vmatpush2.xpose.msra.mxu0 0.0
      %286 = vmatprep.subr.mxu0 0.0
      %287 = vmatpush2.xpose.msra.mxu0 0.0
      %288 = vmatprep.mubr.f32.mxu0 0.0
      %289 = vmatmul.mubr.f32.gmra.mxu0 %v222
      %v290 = vpop.f32.mrf.mxu0
      %v291 = vadd.f32 0.0, %v290
      %v292 = vpop.f32.mrf.mxu0
      %293 = vdwg.mxu0
      %vm294 = vcmask 3072
      %v295 = vsel %vm294, %v221, 0.0
      %296 = vadd.xlane.f32.xlu0 %v295
      %v297 = vpop.xlane.xlu0 %296
      %v298 = vrot.slane %v297, 4
      %v299 = vadd.f32 %v297, %v298
      %v300 = vrot.slane %v299, 2
      %v301 = vadd.f32 %v299, %v300
      %v302 = vrot.slane %v301, 1
      %v303 = vadd.f32 %v301, %v302
      %s304 = vtos %v303
      %v305 = vmul.f32 %v221, 4.0
      %v306 = vstv %s304
      %v307 = vadd.f32 %v306, %v305
      %vm308 = vcmask 27648
      %v309 = vsel %vm308, %v291, 0.0
      %310 = vadd.xlane.f32.xlu0 %v309
      %v311 = vpop.xlane.xlu0 %310
      %v312 = vmul.f32 %v311, 2.0
      %v313 = vsub.f32 %v307, %v312
      %v314 = vrcp.pop 96.0
      %v315 = vmul.f32 %v313, %v314
      %v316 = vsub.f32 1.0, %v315
      %v317 = vmax.f32 %v316, 0.0
      %v318 = vsel %vm294, %v317, 0.0
      %319 = vadd.xlane.f32.xlu0 %v318
      %v320 = vpop.xlane.xlu0 %319
      %v321 = vrot.slane %v320, 4
      %v322 = vadd.f32 %v320, %v321
      %v323 = vrot.slane %v322, 2
      %v324 = vadd.f32 %v322, %v323
      %v325 = vrot.slane %v324, 1
      %v326 = vadd.f32 %v324, %v325
      %s327 = vtos %v326
      %v328 = vrcp.pop 4.0
      %s329 = vtos %v328
      %s330 = smul.f32 %s327, %s329
      %s331 = sadd.f32 %s201, %s216
      %s332 = sadd.f32 %s331, %s330
      %s333 = scalar_lea.smem [#allocation5], 0
      %334 = sst [smem:[%s333]] %s332
      %s335 = scalar_lea.smem [#allocation5], 1
      %336 = sst [smem:[%s335]] %s201
      %s337 = scalar_lea.smem [#allocation5], 2
      %338 = sst [smem:[%s337]] %s216
      %s339 = scalar_lea.smem [#allocation5], 3
      %340 = sst [smem:[%s339]] %s330
    $region25: #{tpu_custom_call.1} parent=1 // pred_fallthru
      _
    // Predicated region
    $region26: #{tpu_custom_call.1} parent=1 // pred_check
      _
    $region27: #{tpu_custom_call.1} parent=1 // pred_check_branch
      %342 = sbr.rel (0) target = $region29
    $region28: #{tpu_custom_call.1} parent=1 // pred_region
      %s344 = ssub.s32 16, 16
      %345 = vsyncadd [#allocation6], %s344
      %348 = dma.smem_to_hbm [#allocation5], 16, %s4, [#allocation6]
    $region29: #{tpu_custom_call.1} parent=1 // pred_fallthru
      _
    // Predicated region
    $region30: #{tpu_custom_call.1} parent=1 // pred_check
      _
    $region31: #{tpu_custom_call.1} parent=1 // pred_check_branch
      %350 = sbr.rel (0) target = $region33
    $region32: #{tpu_custom_call.1} parent=1 // pred_region
      %351 = dma.done [#allocation6], 16
    $region33: #{tpu_custom_call.1} parent=1 // pred_fallthru
      _
    %352 = sfence
    %353 = vsyncpa [#allocation6], 1

</llo_original>
